<compile_context>
chip_gen: v6e
topology: v6e:2x2x1
jax: 0.10.0
libtpu: 0.0.40
codegen_flags: <defaults>
</compile_context>

<pallas_src>
import jax
import jax.numpy as jnp
from jax import lax
from jax.experimental import pallas as pl
from jax.experimental.pallas import tpu as pltpu

BN_EPS = 1e-5        # PyTorch BatchNorm1d default
LANE = 128
SUBLANE = 8


def _round_up(x, m):
    return (x + m - 1) // m * m


# ---------------------------------------------------------------------------
# Pallas kernel: fused (one-hot embedding) -> [Linear -> ReLU]* -> Linear -> head
# ---------------------------------------------------------------------------
def _make_kernel(cards, n_hidden_layers, output_dim, out_pad):
    offsets = []
    off = 0
    for c in cards:
        offsets.append(off)
        off += c
    sum_card = off

    def kernel(idx_ref, *refs):
        out_ref = refs[-1]
        p = refs[:-1]

        idx = idx_ref[...]                                    # [TB, n_feats] int32
        tb = idx.shape[0]

        # ---- fused embedding lookup: one-hot over the concatenated vocabulary ----
        col = lax.broadcasted_iota(jnp.int32, (tb, sum_card), 1)
        oh = jnp.zeros((tb, sum_card), jnp.float32)
        for j, off_j in enumerate(offsets):                   # n_feats is small; unrolled
            tgt = idx[:, j:j + 1] + off_j                     # [TB, 1]
            oh = oh + (col == tgt).astype(jnp.float32)
        h = oh.astype(jnp.bfloat16)                           # emb_drop(eval) == identity

        # ---- hidden layers: Linear (embedding- and BN-folded) -> ReLU ----
        k = 0
        for _ in range(n_hidden_layers):
            w, b = p[k], p[k + 1]
            k += 2
            z = jnp.dot(h, w[...], preferred_element_type=jnp.float32) + b[...]
            h = jnp.maximum(z, 0.0).astype(jnp.bfloat16)      # Dropout(eval) == identity

        # ---- output head ----
        wo, bo = p[k], p[k + 1]
        o = jnp.dot(h, wo[...], preferred_element_type=jnp.float32) + bo[...]
        if output_dim == 1:
            o = jax.nn.sigmoid(o)
        else:
            # TODO(synk): reference calls F.log_softmax(x, dim=self.output_dim) which is an
            # out-of-range dim for 2-D activations when output_dim > 1; we use the class axis.
            valid = lax.broadcasted_iota(jnp.int32, (tb, out_pad), 1) < output_dim
            o = jax.nn.log_softmax(jnp.where(valid, o, -1e30), axis=-1)
        out_ref[...] = o.astype(out_ref.dtype)

    return kernel


# ---------------------------------------------------------------------------
# Wrapper: trace-time parameter folding + tiled pallas_call
# ---------------------------------------------------------------------------
def embedding_model_forward(x_idx, params, *, batch_tile=None):
    """x_idx: int [B, n_feats] categorical indices. Returns [B, output_dim] fp32."""
    embs = params["embs"]
    cards = [int(e.shape[0]) for e in embs]
    dims = [int(e.shape[1]) for e in embs]
    n_feats = len(embs)
    sum_card = sum(cards)
    total_emb = sum(dims)

    # Block-diagonal combined embedding table [sum_card, total_emb]
    e_comb = jnp.zeros((sum_card, total_emb), jnp.float32)
    r = c = 0
    for e in embs:
        e_comb = e_comb.at[r:r + e.shape[0], c:c + e.shape[1]].set(e.astype(jnp.float32))
        r += e.shape[0]
        c += e.shape[1]

    # Fold eval-mode BatchNorm forward into the following Linear; fold the embedding
    # table into the first Linear (one-hot basis).
    folded = []                 # list of (w_f32, b_f32)
    a_prev = None               # [1, prev_out] BN scale
    c_prev = None               # [1, prev_out] BN shift
    for li, layer in enumerate(params["layers"]):
        w = layer["w"].astype(jnp.float32)                    # [fan_in, fan_out]
        b = layer["b"].astype(jnp.float32)                    # [1, fan_out]
        if a_prev is not None:
            b = b + c_prev @ w
            w = a_prev.reshape(-1, 1) * w
        if li == 0:
            w = e_comb @ w                                    # [sum_card, fan_out]
        folded.append((w, b))
        a_prev = layer["gamma"].astype(jnp.float32) * lax.rsqrt(
            layer["var"].astype(jnp.float32) + BN_EPS)
        c_prev = layer["beta"].astype(jnp.float32) - layer["mean"].astype(jnp.float32) * a_prev

    wo = params["w_out"].astype(jnp.float32)
    bo = params["b_out"].astype(jnp.float32)
    if a_prev is not None:
        bo = bo + c_prev @ wo
        wo = a_prev.reshape(-1, 1) * wo
    if not folded:              # no hidden layers: output linear eats the embedding
        wo = e_comb @ wo

    output_dim = int(wo.shape[1])
    out_pad = _round_up(output_dim, LANE)                     # lane-dense output store
    wo = jnp.pad(wo, ((0, 0), (0, out_pad - output_dim)))
    bo = jnp.pad(bo, ((0, 0), (0, out_pad - output_dim)))

    # Flatten params: bf16 weights (MXU path), f32 biases.
    flat = []
    for (w, b) in folded:
        flat += [w.astype(jnp.bfloat16), b]
    flat += [wo.astype(jnp.bfloat16), bo]

    # Batch tiling.
    B = int(x_idx.shape[0])
    if batch_tile is None:
        TB = min(512, _round_up(B, SUBLANE))
    else:
        TB = _round_up(int(batch_tile), SUBLANE)
    B_pad = _round_up(B, TB)
    idx = x_idx.astype(jnp.int32)
    if B_pad != B:
        idx = jnp.pad(idx, ((0, B_pad - B), (0, 0)))
    grid = (B_pad // TB,)

    in_specs = [pl.BlockSpec((TB, n_feats), lambda i: (i, 0))]
    for a in flat:
        in_specs.append(pl.BlockSpec(a.shape, lambda i: (0, 0)))   # resident across steps
    out_specs = pl.BlockSpec((TB, out_pad), lambda i: (i, 0))

    # Cost estimate (advisory).
    flops = 0
    for (w, _) in folded:
        flops += 2 * B_pad * int(w.shape[0]) * int(w.shape[1])
    flops += 2 * B_pad * int(wo.shape[0]) * int(wo.shape[1])
    weight_bytes = sum(int(a.size) * a.dtype.itemsize for a in flat)
    bytes_accessed = int(idx.size) * 4 + B_pad * out_pad * 4 + weight_bytes
    cost = pl.CostEstimate(flops=flops, transcendentals=B_pad * out_pad,
                           bytes_accessed=bytes_accessed)

    # VMEM budget: double-buffered I/O tiles + resident weights + activation headroom.
    max_w = max([int(w.shape[1]) for (w, _) in folded] + [out_pad, sum_card])
    io_bytes = 2 * (TB * n_feats * 4 + TB * out_pad * 4)
    act_bytes = 6 * TB * max_w * 4
    vmem_limit = int(min(max(2 * (weight_bytes + io_bytes + act_bytes), 32 * 1024 * 1024),
                         60 * 1024 * 1024))                   # stay inside v7x's 64 MiB

    kernel = _make_kernel(cards, len(folded), output_dim, out_pad)

    out = pl.pallas_call(
        kernel,
        out_shape=jax.ShapeDtypeStruct((B_pad, out_pad), jnp.float32),
        grid=grid,
        in_specs=in_specs,
        out_specs=out_specs,
        compiler_params=pltpu.CompilerParams(
            dimension_semantics=("parallel",),                # megacore / v7x 2-TC split
            vmem_limit_bytes=vmem_limit),
        cost_estimate=cost,
    )(idx, *flat)

    return out[:B, :output_dim]


# ---------------------------------------------------------------------------
# Deterministic parameter construction (mirrors EmbeddingModel.__init__)
# ---------------------------------------------------------------------------
def init_params(key, emb_szs, layer_sizes, output_dim):
    params = {"embs": [], "layers": []}
    keys = jax.random.split(key, len(emb_szs) + 2 * (len(layer_sizes) + 1))
    ki = 0

    # embeddings: uniform(-sc, sc), sc = 2 / (dim + 1)   (norm_init_emb)
    total_emb = 0
    for (card, dim) in emb_szs:
        sc = 2.0 / (dim + 1)
        params["embs"].append(
            jax.random.uniform(keys[ki], (card, dim), jnp.float32, -sc, sc))
        ki += 1
        total_emb += dim

    sizes = [total_emb] + list(layer_sizes)
    for i in range(len(layer_sizes)):
        fan_in, fan_out = sizes[i], sizes[i + 1]
        std = (2.0 / fan_in) ** 0.5                      # kaiming_normal, fan_in, relu
        w = std * jax.random.normal(keys[ki], (fan_in, fan_out), jnp.float32); ki += 1
        bound = 1.0 / (fan_in ** 0.5)                    # default nn.Linear bias init
        b = jax.random.uniform(keys[ki], (1, fan_out), jnp.float32, -bound, bound); ki += 1
        params["layers"].append({
            "w": w, "b": b,
            "gamma": jnp.ones((1, fan_out), jnp.float32),    # fresh BatchNorm1d
            "beta": jnp.zeros((1, fan_out), jnp.float32),
            "mean": jnp.zeros((1, fan_out), jnp.float32),
            "var": jnp.ones((1, fan_out), jnp.float32),
        })

    fan_in = sizes[-1]
    std = (2.0 / fan_in) ** 0.5
    params["w_out"] = std * jax.random.normal(keys[ki], (fan_in, output_dim), jnp.float32); ki += 1
    bound = 1.0 / (fan_in ** 0.5)
    params["b_out"] = jax.random.uniform(keys[ki], (1, output_dim), jnp.float32, -bound, bound)
    return params


# ---------------------------------------------------------------------------
# Pure-JAX reference (eval-mode semantics) for a numerical sanity check
# ---------------------------------------------------------------------------
def _reference_forward(x_idx, params):
    lkups = [emb[x_idx[:, i]] for i, emb in enumerate(params["embs"])]
    h = jnp.concatenate(lkups, axis=1).astype(jnp.float32)
    for layer in params["layers"]:
        h = jnp.maximum(h @ layer["w"] + layer["b"], 0.0)
        h = layer["gamma"] * (h - layer["mean"]) * lax.rsqrt(layer["var"] + BN_EPS) + layer["beta"]
    o = h @ params["w_out"] + params["b_out"]
    if params["w_out"].shape[1] == 1:
        return jax.nn.sigmoid(o)
    return jax.nn.log_softmax(o, axis=-1)


# ---------------------------------------------------------------------------
if __name__ == "__main__":
    key = jax.random.PRNGKey(0)
    k_params, k_data = jax.random.split(key)

    emb_szs = [(5, 2), (10, 4), (8, 3)]      # (cardinality, embedding_dim)
    layer_sizes = [32, 16]
    output_dim = 1                           # -> sigmoid head
    batch = 8

    params = init_params(k_params, emb_szs, layer_sizes, output_dim)

    # categorical input indices [B, n_feats], each column < its cardinality
    dkeys = jax.random.split(k_data, len(emb_szs))
    cols = [jax.random.randint(dkeys[j], (batch, 1), 0, card, jnp.int32)
            for j, (card, _) in enumerate(emb_szs)]
    x = jnp.concatenate(cols, axis=1)        # [8, 3] int32

    out = embedding_model_forward(x, params)
    out = jax.block_until_ready(out)

    ref = jax.block_until_ready(_reference_forward(x, params))

    assert out.shape == (batch, output_dim)
    assert bool(jnp.all(jnp.isfinite(out)))
    assert bool(jnp.all((out >= 0.0) & (out <= 1.0)))          # sigmoid output range
    assert float(jnp.max(jnp.abs(out - ref))) < 5e-2           # bf16-weight tolerance
    print("KERNEL_OK")
</pallas_src>

<mosaic_0001>
module attributes {stable_mosaic.version = 11 : i64} {
  func.func @kernel(%arg0: i32, %arg1: memref<8x3xi32, #tpu.memory_space<vmem>>, %arg2: memref<23x32xbf16, #tpu.memory_space<vmem>>, %arg3: memref<1x32xf32, #tpu.memory_space<vmem>>, %arg4: memref<32x16xbf16, #tpu.memory_space<vmem>>, %arg5: memref<1x16xf32, #tpu.memory_space<vmem>>, %arg6: memref<16x128xbf16, #tpu.memory_space<vmem>>, %arg7: memref<1x128xf32, #tpu.memory_space<vmem>>, %arg8: memref<8x128xf32, #tpu.memory_space<vmem>>) attributes {dimension_semantics = [#tpu.dimension_semantics<parallel>], iteration_bounds = array<i64: 1>, scalar_prefetch = 0 : i64, scratch_operands = 0 : i64, tpu.core_type = #tpu.core_type<tc>, window_params = [{transform_indices = @transform_0, window_bounds = array<i64: 8, 3>}, {pipeline_mode = #tpu.pipeline_mode<synchronous>, transform_indices = @transform_1, window_bounds = array<i64: 23, 32>}, {pipeline_mode = #tpu.pipeline_mode<synchronous>, transform_indices = @transform_2, window_bounds = array<i64: 1, 32>}, {pipeline_mode = #tpu.pipeline_mode<synchronous>, transform_indices = @transform_3, window_bounds = array<i64: 32, 16>}, {pipeline_mode = #tpu.pipeline_mode<synchronous>, transform_indices = @transform_4, window_bounds = array<i64: 1, 16>}, {pipeline_mode = #tpu.pipeline_mode<synchronous>, transform_indices = @transform_5, window_bounds = array<i64: 16, 128>}, {pipeline_mode = #tpu.pipeline_mode<synchronous>, transform_indices = @transform_6, window_bounds = array<i64: 1, 128>}, {transform_indices = @transform_7, window_bounds = array<i64: 8, 128>}]} {
    %c0 = arith.constant 0 : index
    %c0_0 = arith.constant 0 : index
    %0 = vector.load %arg1[%c0, %c0_0] : memref<8x3xi32, #tpu.memory_space<vmem>>, vector<8x3xi32>
    %1 = tpu.iota {dimensions = array<i32: 1>} : vector<8x23xi32>
    %cst = arith.constant 0.000000e+00 : f32
    %2 = vector.broadcast %cst : f32 to vector<8x23xf32>
    %3 = vector.extract_strided_slice %0 {offsets = [0, 0], sizes = [8, 1], strides = [1, 1]} : vector<8x3xi32> to vector<8x1xi32>
    %c0_i32 = arith.constant 0 : i32
    %4 = vector.broadcast %c0_i32 : i32 to vector<8x1xi32>
    %5 = arith.addi %3, %4 : vector<8x1xi32>
    %6 = vector.broadcast %5 : vector<8x1xi32> to vector<8x23xi32>
    %7 = arith.cmpi eq, %1, %6 : vector<8x23xi32>
    %8 = arith.extui %7 : vector<8x23xi1> to vector<8x23xi32>
    %9 = arith.sitofp %8 : vector<8x23xi32> to vector<8x23xf32>
    %10 = arith.addf %2, %9 : vector<8x23xf32>
    %11 = vector.extract_strided_slice %0 {offsets = [0, 1], sizes = [8, 1], strides = [1, 1]} : vector<8x3xi32> to vector<8x1xi32>
    %c5_i32 = arith.constant 5 : i32
    %12 = vector.broadcast %c5_i32 : i32 to vector<8x1xi32>
    %13 = arith.addi %11, %12 : vector<8x1xi32>
    %14 = vector.broadcast %13 : vector<8x1xi32> to vector<8x23xi32>
    %15 = arith.cmpi eq, %1, %14 : vector<8x23xi32>
    %16 = arith.extui %15 : vector<8x23xi1> to vector<8x23xi32>
    %17 = arith.sitofp %16 : vector<8x23xi32> to vector<8x23xf32>
    %18 = arith.addf %10, %17 : vector<8x23xf32>
    %19 = vector.extract_strided_slice %0 {offsets = [0, 2], sizes = [8, 1], strides = [1, 1]} : vector<8x3xi32> to vector<8x1xi32>
    %c15_i32 = arith.constant 15 : i32
    %20 = vector.broadcast %c15_i32 : i32 to vector<8x1xi32>
    %21 = arith.addi %19, %20 : vector<8x1xi32>
    %22 = vector.broadcast %21 : vector<8x1xi32> to vector<8x23xi32>
    %23 = arith.cmpi eq, %1, %22 : vector<8x23xi32>
    %24 = arith.extui %23 : vector<8x23xi1> to vector<8x23xi32>
    %25 = arith.sitofp %24 : vector<8x23xi32> to vector<8x23xf32>
    %26 = arith.addf %18, %25 : vector<8x23xf32>
    %27 = arith.truncf %26 : vector<8x23xf32> to vector<8x23xbf16>
    %c0_1 = arith.constant 0 : index
    %c0_2 = arith.constant 0 : index
    %28 = vector.load %arg2[%c0_1, %c0_2] : memref<23x32xbf16, #tpu.memory_space<vmem>>, vector<23x32xbf16>
    %cst_3 = arith.constant dense<0.000000e+00> : vector<8x32xf32>
    %29 = tpu.matmul %27, %28, %cst_3 {dimension_numbers = #tpu.dot_dimension_numbers<[1], [0], [0], [1], [0, 0, 1, 1], [], []>} : vector<8x23xbf16>, vector<23x32xbf16>, vector<8x32xf32> -> vector<8x32xf32>
    %c0_4 = arith.constant 0 : index
    %c0_5 = arith.constant 0 : index
    %30 = vector.load %arg3[%c0_4, %c0_5] : memref<1x32xf32, #tpu.memory_space<vmem>>, vector<1x32xf32>
    %31 = vector.broadcast %30 : vector<1x32xf32> to vector<8x32xf32>
    %32 = arith.addf %29, %31 : vector<8x32xf32>
    %cst_6 = arith.constant 0.000000e+00 : f32
    %33 = vector.broadcast %cst_6 : f32 to vector<8x32xf32>
    %34 = arith.maximumf %32, %33 : vector<8x32xf32>
    %35 = arith.truncf %34 : vector<8x32xf32> to vector<8x32xbf16>
    %c0_7 = arith.constant 0 : index
    %c0_8 = arith.constant 0 : index
    %36 = vector.load %arg4[%c0_7, %c0_8] : memref<32x16xbf16, #tpu.memory_space<vmem>>, vector<32x16xbf16>
    %cst_9 = arith.constant dense<0.000000e+00> : vector<8x16xf32>
    %37 = tpu.matmul %35, %36, %cst_9 {dimension_numbers = #tpu.dot_dimension_numbers<[1], [0], [0], [1], [0, 0, 1, 1], [], []>} : vector<8x32xbf16>, vector<32x16xbf16>, vector<8x16xf32> -> vector<8x16xf32>
    %c0_10 = arith.constant 0 : index
    %c0_11 = arith.constant 0 : index
    %38 = vector.load %arg5[%c0_10, %c0_11] : memref<1x16xf32, #tpu.memory_space<vmem>>, vector<1x16xf32>
    %39 = vector.broadcast %38 : vector<1x16xf32> to vector<8x16xf32>
    %40 = arith.addf %37, %39 : vector<8x16xf32>
    %cst_12 = arith.constant 0.000000e+00 : f32
    %41 = vector.broadcast %cst_12 : f32 to vector<8x16xf32>
    %42 = arith.maximumf %40, %41 : vector<8x16xf32>
    %43 = arith.truncf %42 : vector<8x16xf32> to vector<8x16xbf16>
    %c0_13 = arith.constant 0 : index
    %c0_14 = arith.constant 0 : index
    %44 = vector.load %arg6[%c0_13, %c0_14] : memref<16x128xbf16, #tpu.memory_space<vmem>>, vector<16x128xbf16>
    %cst_15 = arith.constant dense<0.000000e+00> : vector<8x128xf32>
    %45 = tpu.matmul %43, %44, %cst_15 {dimension_numbers = #tpu.dot_dimension_numbers<[1], [0], [0], [1], [0, 0, 1, 1], [], []>} : vector<8x16xbf16>, vector<16x128xbf16>, vector<8x128xf32> -> vector<8x128xf32>
    %c0_16 = arith.constant 0 : index
    %c0_17 = arith.constant 0 : index
    %46 = vector.load %arg7[%c0_16, %c0_17] : memref<1x128xf32, #tpu.memory_space<vmem>>, vector<1x128xf32>
    %47 = vector.broadcast %46 : vector<1x128xf32> to vector<8x128xf32>
    %48 = arith.addf %45, %47 : vector<8x128xf32>
    %49 = arith.negf %48 : vector<8x128xf32>
    %50 = math.exp %49 : vector<8x128xf32>
    %cst_18 = arith.constant 1.000000e+00 : f32
    %51 = vector.broadcast %cst_18 : f32 to vector<8x128xf32>
    %52 = arith.addf %51, %50 : vector<8x128xf32>
    %53 = arith.divf %51, %52 : vector<8x128xf32>
    %c0_19 = arith.constant 0 : index
    %c0_20 = arith.constant 0 : index
    %54 = vector.load %arg8[%c0_19, %c0_20] : memref<8x128xf32, #tpu.memory_space<vmem>>, vector<8x128xf32>
    tpu.vector_store %arg8[%c0_19, %c0_20], %53 {strides = array<i32>} : memref<8x128xf32, #tpu.memory_space<vmem>>, vector<8x128xf32>,
    return
  }
  func.func @transform_0(%arg0: i32) -> (i32, i32) {
    %c0_i32 = arith.constant 0 : i32
    %c0_i32_0 = arith.constant 0 : i32
    return %arg0, %c0_i32 : i32, i32
  }
  func.func @transform_1(%arg0: i32) -> (i32, i32) {
    %c0_i32 = arith.constant 0 : i32
    %c0_i32_0 = arith.constant 0 : i32
    %c0_i32_1 = arith.constant 0 : i32
    return %c0_i32, %c0_i32_0 : i32, i32
  }
  func.func @transform_2(%arg0: i32) -> (i32, i32) {
    %c0_i32 = arith.constant 0 : i32
    %c0_i32_0 = arith.constant 0 : i32
    %c0_i32_1 = arith.constant 0 : i32
    return %c0_i32, %c0_i32_0 : i32, i32
  }
  func.func @transform_3(%arg0: i32) -> (i32, i32) {
    %c0_i32 = arith.constant 0 : i32
    %c0_i32_0 = arith.constant 0 : i32
    %c0_i32_1 = arith.constant 0 : i32
    return %c0_i32, %c0_i32_0 : i32, i32
  }
  func.func @transform_4(%arg0: i32) -> (i32, i32) {
    %c0_i32 = arith.constant 0 : i32
    %c0_i32_0 = arith.constant 0 : i32
    %c0_i32_1 = arith.constant 0 : i32
    return %c0_i32, %c0_i32_0 : i32, i32
  }
  func.func @transform_5(%arg0: i32) -> (i32, i32) {
    %c0_i32 = arith.constant 0 : i32
    %c0_i32_0 = arith.constant 0 : i32
    %c0_i32_1 = arith.constant 0 : i32
    return %c0_i32, %c0_i32_0 : i32, i32
  }
  func.func @transform_6(%arg0: i32) -> (i32, i32) {
    %c0_i32 = arith.constant 0 : i32
    %c0_i32_0 = arith.constant 0 : i32
    %c0_i32_1 = arith.constant 0 : i32
    return %c0_i32, %c0_i32_0 : i32, i32
  }
  func.func @transform_7(%arg0: i32) -> (i32, i32) {
    %c0_i32 = arith.constant 0 : i32
    %c0_i32_0 = arith.constant 0 : i32
    return %arg0, %c0_i32 : i32, i32
  }
}

</mosaic_0001>

<llo_original>
// kernel: tpu_custom_call.1
$region0: #{tpu_custom_call.1}
  #allocation0 [shape = 'u32[]', space=smem, size = 0x4, offset = 0x4, fixed_abs, tag = 'smem constant byte address 0x4 - core index']
  #allocation1 [shape = 'u32[144,128]{1,0:T(1,128)}', space=vmem, size = 0x12000, scoped, tag = 'internal scratch']
  %s0 = inlined_call_operand.vmem [shape: s32[8,3], index: 0, kind: input, shape index: {}]
  %s1 = inlined_call_operand.vmem [shape: bf16[23,32], index: 1, kind: input, shape index: {}]
  %s2 = inlined_call_operand.vmem [shape: f32[1,32], index: 2, kind: input, shape index: {}]
  %s3 = inlined_call_operand.vmem [shape: bf16[32,16], index: 3, kind: input, shape index: {}]
  %s4 = inlined_call_operand.vmem [shape: f32[1,16], index: 4, kind: input, shape index: {}]
  %s5 = inlined_call_operand.vmem [shape: bf16[16,128], index: 5, kind: input, shape index: {}]
  %s6 = inlined_call_operand.vmem [shape: f32[1,128], index: 6, kind: input, shape index: {}]
  %s7 = inlined_call_operand.hbm [shape: f32[8,128], index: 7, kind: output, shape index: {}]
  %s8 = sld [smem:[#allocation0]]
  $region38: #{tpu_custom_call.1} parent=0
    _
  %s10 = ssub.s32 1, %s8
  %s11 = scalar_select 0, %s10, %s8
  $region1: #{tpu_custom_call.1} parent=0
    #allocation2 [shape = 'u8[4096]{0}', space=vmem, size = 0x1000, scoped, tag = 'output window, operand 0, single buffered']
    #allocation3 [shape = 's32[1]{0}', space=sflag, size = 0x4, scoped, tag = 'scoped memory for tpu_custom_call.1']
    %12 = vsyncpa [#allocation3], 0
    // Predicated region
    $region2: #{tpu_custom_call.1} parent=1 // pred_check
      _
    $region3: #{tpu_custom_call.1} parent=1 // pred_check_branch
      %14 = sbr.rel (0) target = $region5
    $region4: #{tpu_custom_call.1} parent=1 // pred_region
      _
    $region5: #{tpu_custom_call.1} parent=1 // pred_fallthru
      _
    // Predicated region
    $region6: #{tpu_custom_call.1} parent=1 // pred_check
      _
    $region7: #{tpu_custom_call.1} parent=1 // pred_check_branch
      %16 = sbr.rel (0) target = $region9
    $region8: #{tpu_custom_call.1} parent=1 // pred_region
      _
    $region9: #{tpu_custom_call.1} parent=1 // pred_fallthru
      _
    // Predicated region
    $region10: #{tpu_custom_call.1} parent=1 // pred_check
      _
    $region11: #{tpu_custom_call.1} parent=1 // pred_check_branch
      %18 = sbr.rel (0) target = $region13
    $region12: #{tpu_custom_call.1} parent=1 // pred_region
      _
    $region13: #{tpu_custom_call.1} parent=1 // pred_fallthru
      _
    // Predicated region
    $region14: #{tpu_custom_call.1} parent=1 // pred_check
      _
    $region15: #{tpu_custom_call.1} parent=1 // pred_check_branch
      %20 = sbr.rel (0) target = $region17
    $region16: #{tpu_custom_call.1} parent=1 // pred_region
      _
    $region17: #{tpu_custom_call.1} parent=1 // pred_fallthru
      _
    // Predicated region
    $region18: #{tpu_custom_call.1} parent=1 // pred_check
      _
    $region19: #{tpu_custom_call.1} parent=1 // pred_check_branch
      %22 = sbr.rel (0) target = $region21
    $region20: #{tpu_custom_call.1} parent=1 // pred_region
      _
    $region21: #{tpu_custom_call.1} parent=1 // pred_fallthru
      _
    // Predicated region
    $region22: #{tpu_custom_call.1} parent=1 // pred_check
      _
    $region23: #{tpu_custom_call.1} parent=1 // pred_check_branch
      %24 = sbr.rel (0) target = $region25
    $region24: #{tpu_custom_call.1} parent=1 // pred_region
      _
    $region25: #{tpu_custom_call.1} parent=1 // pred_fallthru
      _
    // Predicated region
    $region26: #{tpu_custom_call.1} parent=1 // pred_check
      _
    $region27: #{tpu_custom_call.1} parent=1 // pred_check_branch
      %26 = sbr.rel (0) target = $region29
    $region28: #{tpu_custom_call.1} parent=1 // pred_region
      _
    $region29: #{tpu_custom_call.1} parent=1 // pred_fallthru
      _
    %v28 = vld [vmem:[%s0] sm:$0xff]
    %v29 = vlaneseq
    %v30 = vand.u32 %v29, 127
    %31 = vset.pattern.permute.xlu0 0
    %32 = vperm.xlu0 %31, %v28
    %v33 = vpop.permute.xlu0 %32
    %vm34 = vcmp.eq.s32.totalorder %v30, %v33
    %v35 = vsel %vm34, 1, 0
    %v36 = vcvt.s32.f32 %v35
    %v37 = vadd.f32 %v36, 0.0
    %v38 = vadd.s32 %v28, 5
    %39 = vset.pattern.permute.xlu0 1
    %40 = vperm.xlu0 %39, %v38
    %v41 = vpop.permute.xlu0 %40
    %vm42 = vcmp.eq.s32.totalorder %v30, %v41
    %v43 = vsel %vm42, 1, 0
    %v44 = vcvt.s32.f32 %v43
    %v45 = vadd.f32 %v37, %v44
    %v46 = vadd.s32 %v28, 15
    %47 = vset.pattern.permute.xlu0 2
    %48 = vperm.xlu0 %47, %v46
    %v49 = vpop.permute.xlu0 %48
    %vm50 = vcmp.eq.s32.totalorder %v30, %v49
    %v51 = vsel %vm50, 1, 0
    %v52 = vcvt.s32.f32 %v51
    %v53 = vadd.f32 %v45, %v52
    %v54 = vpack.c.bf16 %v53, %v53
    %v55 = vld [vmem:[%s1] sm:$0xf]
    %v56 = vld [vmem:[%s1 + $0x4] sm:$0xf]
    %v57 = vld [vmem:[%s1 + $0x8] sm:$0xf]
    %v58 = vld [vmem:[%s2] sm:$0x1]
    %v60 = vlaneseq
    %v61 = vshrl.u32 %v60, 7
    %v62 = vsub.s32 0, %v61
    %v63 = vrot.slane %v58, %v62
    %v68 = vunpack.c.l.b16 %v55
    %v69 = vunpack.c.l.b16 %v56
    %v70 = vunpack.c.l.b16 %v57
    %v71 = vpack.c.b16 %v69, %v68
    %v72 = vpack.c.b16 %v70, %v70
    %vm74 = vcmask 187392
    %v76 = vsel %vm74, %v54, 0
    %vm78 = vcmask 1042432
    %vm79 = vcmask 1043456
    %v80 = vsel %vm78, 4294967295, 65535
    %v81 = vsel %vm79, %v80, 0
    %v83 = vand.u32 %v72, %v81
    %85 = vmatprep.subr.bf16.mxu0 0
    %86 = vmatpush1.bf16.msra.mxu0 0
    %87 = vmatprep.subr.bf16.mxu0 0
    %88 = vmatpush1.bf16.msra.mxu0 0
    %89 = vmatprep.subr.bf16.mxu0 0
    %90 = vmatpush1.bf16.msra.mxu0 0
    %91 = vmatprep.subr.bf16.mxu0 0
    %92 = vmatpush1.bf16.msra.mxu0 0
    %93 = vmatprep.subr.bf16.mxu0 0
    %94 = vmatpush1.bf16.msra.mxu0 0
    %95 = vmatprep.subr.bf16.mxu0 0
    %96 = vmatpush1.bf16.msra.mxu0 0
    %97 = vmatprep.subr.bf16.mxu0 0
    %98 = vmatpush1.bf16.msra.mxu0 %v83
    %99 = vmatprep.subr.bf16.mxu0 0
    %100 = vmatpush1.bf16.msra.mxu0 %v71
    %101 = vmatprep.subr.bf16.mxu0 0
    %102 = vmatpush2.bf16.msra.mxu0 0
    %103 = vmatprep.subr.bf16.mxu0 0
    %104 = vmatpush2.bf16.msra.mxu0 0
    %105 = vmatprep.subr.bf16.mxu0 0
    %106 = vmatpush2.bf16.msra.mxu0 0
    %107 = vmatprep.subr.bf16.mxu0 0
    %108 = vmatpush2.bf16.msra.mxu0 0
    %109 = vmatprep.subr.bf16.mxu0 0
    %110 = vmatpush2.bf16.msra.mxu0 0
    %111 = vmatprep.subr.bf16.mxu0 0
    %112 = vmatpush2.bf16.msra.mxu0 0
    %113 = vmatprep.subr.bf16.mxu0 0
    %114 = vmatpush2.bf16.msra.mxu0 0
    %115 = vmatprep.subr.bf16.mxu0 0
    %116 = vmatpush2.bf16.msra.mxu0 0
    %117 = vmatprep.mubr.bf16.mxu0 0
    %118 = vmatmul.mubr.bf16.gmra.mxu0 %v76
    %v119 = vpop.f32.mrf.mxu0
    %v120 = vadd.f32 %v63, %v119
    %v121 = vpop.f32.mrf.mxu0
    %v122 = vpop.f32.mrf.mxu0
    %v123 = vpop.f32.mrf.mxu0
    %124 = vdwg.mxu0
    %v125 = vmax.f32 %v120, 0.0
    %v126 = vpack.c.bf16 %v125, %v125
    %v127 = vld [vmem:[%s3] sm:$0xf]
    %v128 = vld [vmem:[%s3 + $0x4] sm:$0xf]
    %v129 = vld [vmem:[%s3 + $0x8] sm:$0xf]
    %v130 = vld [vmem:[%s3 + $0xc] sm:$0xf]
    %v131 = vld [vmem:[%s4] sm:$0x1]
    %v133 = vlaneseq
    %v134 = vshrl.u32 %v133, 7
    %v135 = vsub.s32 0, %v134
    %v136 = vrot.slane %v131, %v135
    %v142 = vunpack.c.l.b16 %v127
    %v143 = vunpack.c.l.b16 %v128
    %v144 = vunpack.c.l.b16 %v129
    %v145 = vunpack.c.l.b16 %v130
    %v146 = vpack.c.b16 %v143, %v142
    %v147 = vpack.c.b16 %v145, %v144
    %vm150 = vcmask 261120
    %v152 = vsel %vm150, %v126, 0
    %154 = vmatprep.subr.bf16.mxu0 0
    %155 = vmatpush1.bf16.msra.mxu0 0
    %156 = vmatprep.subr.bf16.mxu0 0
    %157 = vmatpush1.bf16.msra.mxu0 0
    %158 = vmatprep.subr.bf16.mxu0 0
    %159 = vmatpush1.bf16.msra.mxu0 0
    %160 = vmatprep.subr.bf16.mxu0 0
    %161 = vmatpush1.bf16.msra.mxu0 0
    %162 = vmatprep.subr.bf16.mxu0 0
    %163 = vmatpush1.bf16.msra.mxu0 0
    %164 = vmatprep.subr.bf16.mxu0 0
    %165 = vmatpush1.bf16.msra.mxu0 0
    %166 = vmatprep.subr.bf16.mxu0 0
    %167 = vmatpush1.bf16.msra.mxu0 %v147
    %168 = vmatprep.subr.bf16.mxu0 0
    %169 = vmatpush1.bf16.msra.mxu0 %v146
    %170 = vmatprep.subr.bf16.mxu0 0
    %171 = vmatpush2.bf16.msra.mxu0 0
    %172 = vmatprep.subr.bf16.mxu0 0
    %173 = vmatpush2.bf16.msra.mxu0 0
    %174 = vmatprep.subr.bf16.mxu0 0
    %175 = vmatpush2.bf16.msra.mxu0 0
    %176 = vmatprep.subr.bf16.mxu0 0
    %177 = vmatpush2.bf16.msra.mxu0 0
    %178 = vmatprep.subr.bf16.mxu0 0
    %179 = vmatpush2.bf16.msra.mxu0 0
    %180 = vmatprep.subr.bf16.mxu0 0
    %181 = vmatpush2.bf16.msra.mxu0 0
    %182 = vmatprep.subr.bf16.mxu0 0
    %183 = vmatpush2.bf16.msra.mxu0 0
    %184 = vmatprep.subr.bf16.mxu0 0
    %185 = vmatpush2.bf16.msra.mxu0 0
    %186 = vmatprep.mubr.bf16.mxu0 0
    %187 = vmatmul.mubr.bf16.gmra.mxu0 %v152
    %v188 = vpop.f32.mrf.mxu0
    %v189 = vadd.f32 %v136, %v188
    %v190 = vpop.f32.mrf.mxu0
    %v191 = vpop.f32.mrf.mxu0
    %v192 = vpop.f32.mrf.mxu0
    %193 = vdwg.mxu0
    %v194 = vmax.f32 %v189, 0.0
    %v195 = vpack.c.bf16 %v194, %v194
    %v196 = vld [vmem:[%s5] sm:$0xf]
    %v197 = vld [vmem:[%s5 + $0x4] sm:$0xf]
    %v198 = vld [vmem:[%s6] sm:$0x1]
    %v200 = vlaneseq
    %v201 = vshrl.u32 %v200, 7
    %v202 = vsub.s32 0, %v201
    %v203 = vrot.slane %v198, %v202
    %v207 = vunpack.c.l.b16 %v196
    %v208 = vunpack.c.l.b16 %v197
    %v209 = vpack.c.b16 %v208, %v207
    %vm211 = vcmask 130048
    %v213 = vsel %vm211, %v195, 0
    %215 = vmatprep.subr.bf16.mxu0 0
    %216 = vmatpush1.bf16.msra.mxu0 0
    %217 = vmatprep.subr.bf16.mxu0 0
    %218 = vmatpush1.bf16.msra.mxu0 0
    %219 = vmatprep.subr.bf16.mxu0 0
    %220 = vmatpush1.bf16.msra.mxu0 0
    %221 = vmatprep.subr.bf16.mxu0 0
    %222 = vmatpush1.bf16.msra.mxu0 0
    %223 = vmatprep.subr.bf16.mxu0 0
    %224 = vmatpush1.bf16.msra.mxu0 0
    %225 = vmatprep.subr.bf16.mxu0 0
    %226 = vmatpush1.bf16.msra.mxu0 0
    %227 = vmatprep.subr.bf16.mxu0 0
    %228 = vmatpush1.bf16.msra.mxu0 0
    %229 = vmatprep.subr.bf16.mxu0 0
    %230 = vmatpush1.bf16.msra.mxu0 %v209
    %231 = vmatprep.subr.bf16.mxu0 0
    %232 = vmatpush2.bf16.msra.mxu0 0
    %233 = vmatprep.subr.bf16.mxu0 0
    %234 = vmatpush2.bf16.msra.mxu0 0
    %235 = vmatprep.subr.bf16.mxu0 0
    %236 = vmatpush2.bf16.msra.mxu0 0
    %237 = vmatprep.subr.bf16.mxu0 0
    %238 = vmatpush2.bf16.msra.mxu0 0
    %239 = vmatprep.subr.bf16.mxu0 0
    %240 = vmatpush2.bf16.msra.mxu0 0
    %241 = vmatprep.subr.bf16.mxu0 0
    %242 = vmatpush2.bf16.msra.mxu0 0
    %243 = vmatprep.subr.bf16.mxu0 0
    %244 = vmatpush2.bf16.msra.mxu0 0
    %245 = vmatprep.subr.bf16.mxu0 0
    %246 = vmatpush2.bf16.msra.mxu0 0
    %247 = vmatprep.mubr.bf16.mxu0 0
    %248 = vmatmul.mubr.bf16.gmra.mxu0 %v213
    %v249 = vpop.f32.mrf.mxu0
    %v250 = vadd.f32 %v203, %v249
    %v251 = vpop.f32.mrf.mxu0
    %v252 = vpop.f32.mrf.mxu0
    %v253 = vpop.f32.mrf.mxu0
    %254 = vdwg.mxu0
    %v255 = vxor.u32 %v250, 2147483648
    %v256 = vmul.f32 %v255, 1.442695
    %v257 = vpow.pop %v256
    %v258 = vadd.f32 %v257, 1.0
    %v259 = vrcp.pop %v258
    %v260 = vmul.f32 1.0, %v259
    %261 = vst [vmem:[#allocation2] sm:$0xff] %v260
    // Predicated region
    $region30: #{tpu_custom_call.1} parent=1 // pred_check
      _
    $region31: #{tpu_custom_call.1} parent=1 // pred_check_branch
      %263 = sbr.rel (0) target = $region33
    $region32: #{tpu_custom_call.1} parent=1 // pred_region
      %s265 = ssub.s32 128, 128
      %266 = vsyncadd [#allocation3], %s265
      %s268 = sshll.u32 [#allocation2], 4
      %s269 = int_to_ptr.vmem [resolvable:$true] %s268
      %271 = dma.vmem_to_hbm [thread:$0]  %s269, 128, %s7, [#allocation3]
    $region33: #{tpu_custom_call.1} parent=1 // pred_fallthru
      _
    // Predicated region
    $region34: #{tpu_custom_call.1} parent=1 // pred_check
      _
    $region35: #{tpu_custom_call.1} parent=1 // pred_check_branch
      %273 = sbr.rel (0) target = $region37
    $region36: #{tpu_custom_call.1} parent=1 // pred_region
      %274 = dma.done [#allocation3], 128
    $region37: #{tpu_custom_call.1} parent=1 // pred_fallthru
      _
    %275 = vsyncpa [#allocation3], 1

</llo_original>
